<compile_context>
chip_gen: v7x
topology: tpu7x:2x2x1
jax: 0.10.0
libtpu: 0.0.40
codegen_flags: <defaults>
</compile_context>

<pallas_src>
import math

import jax
import jax.numpy as jnp
from jax.experimental import pallas as pl
from jax.experimental.pallas import tpu as pltpu

BN_EPS = 1e-5
LANE = 128
SUBLANE = 8


def _round_up(v, m):
    return (v + m - 1) // m * m


# ----------------------------------------------------------------------------
# Kernel: one batch tile per grid step; weights stay VMEM-resident.
# ----------------------------------------------------------------------------
def _fnn2l_kernel(x_ref, w1_ref, b1_ref, w2_ref, b2_ref, o_ref):
    # fc1: cast the streamed x tile to bf16 in-kernel (no host-side pad/cast
    # pass over x; if the caller already supplies bf16 x this is a no-op and
    # the input stream is halved). f32 accumulation on the MXU.
    x = x_ref[...].astype(jnp.bfloat16)
    h = jnp.dot(x, w1_ref[...], preferred_element_type=jnp.float32)  # [tm, Hp]
    h = jnp.maximum(h + b1_ref[...], 0.0)                            # bias+ReLU (f32)

    # fc2 with eval-mode BN folded in (host side). Kept in f32: it is a
    # negligible fraction of FLOPs/bytes and keeps the BN scale un-rounded.
    y = jnp.dot(h, w2_ref[...], preferred_element_type=jnp.float32)  # [tm, O]
    o_ref[...] = y + b2_ref[...]


# ----------------------------------------------------------------------------
# Host-side parameter preparation (do ONCE, outside the per-call hot path).
# ----------------------------------------------------------------------------
def prepare_params(params):
    """Fold eval-mode BatchNorm into fc2; pad only the hidden (lane) axis."""
    w1, b1, gamma, beta, mean, var, w2, b2 = params
    D, H = w1.shape
    O = w2.shape[1]

    # BN(ReLU(xW1+b1)) @ W2 + b2 == ReLU(xW1+b1) @ (scale[:,None]*W2) + (shift@W2 + b2)
    scale = gamma * jax.lax.rsqrt(var + BN_EPS)          # [1, H]
    shift = beta - mean * scale                          # [1, H]
    w2_f = scale.reshape(H, 1) * w2                      # [H, O]
    b2_f = shift @ w2 + b2                               # [1, O]

    # Only the hidden dim is padded (lane-dense fc1 output / fc2 contraction).
    # D and O stay at their real sizes: full-extent block dims are legal and
    # avoid the 4x / 128x padded HBM traffic flagged in the review.
    Hp = _round_up(H, LANE)

    w1_p = jnp.zeros((D, Hp), jnp.bfloat16).at[:, :H].set(w1.astype(jnp.bfloat16))
    b1_p = jnp.zeros((1, Hp), jnp.float32).at[:, :H].set(b1)
    w2_p = jnp.zeros((Hp, O), jnp.float32).at[:H, :].set(w2_f)   # f32 (accuracy)
    b2_p = b2_f.astype(jnp.float32)                              # [1, O]
    return (w1_p, b1_p, w2_p, b2_p), (D, O)


# ----------------------------------------------------------------------------
# Generation-aware tile / VMEM-limit selection.
# ----------------------------------------------------------------------------
def _pick_tile_and_vmem(B, D, Hp, O, weight_bytes, x_itemsize):
    try:
        info = pltpu.get_tpu_info()
        vmem_cap = getattr(info, "vmem_capacity_bytes", None) or 64 * 1024 * 1024
    except Exception:
        vmem_cap = 64 * 1024 * 1024                      # conservative (v7x-sized)

    if vmem_cap >= 96 * 1024 * 1024:                     # v5e / v6e: 128 MiB VMEM
        vmem_limit = 100 * 1024 * 1024
        tm_max = 1024
    else:                                                # v7x: 64 MiB per TC
        vmem_limit = 48 * 1024 * 1024
        tm_max = 512

    tm = min(tm_max, _round_up(B, SUBLANE))
    budget = int(vmem_limit * 0.75)
    # Resident weights + double-buffered x/out tiles + f32 h intermediate.
    while tm > SUBLANE:
        need = (weight_bytes
                + 2 * tm * D * x_itemsize                # double-buffered x tile
                + 2 * tm * O * 4                         # double-buffered out tile
                + tm * Hp * 4)                           # h intermediate (f32)
        if need <= budget:
            break
        tm = max(SUBLANE, _round_up(tm // 2, SUBLANE))
    # TODO(synk): if the resident weights alone exceed the budget (very large
    # production input_size), add a K-tiling grid axis for fc1 with an f32
    # accumulator scratch instead of shrinking tm further.
    return tm, vmem_limit


# ----------------------------------------------------------------------------
# Wrapper
# ----------------------------------------------------------------------------
def fnn_2l_forward(x, prepared, dims):
    """Fused forward pass. x: [B, input_size] (float32 or bfloat16)."""
    w1_p, b1_p, w2_p, b2_p = prepared
    D, O = dims
    B = x.shape[0]
    Hp = w1_p.shape[1]
    assert x.shape[1] == D, (x.shape, D)

    weight_bytes = (w1_p.size * w1_p.dtype.itemsize + b1_p.size * 4
                    + w2_p.size * 4 + b2_p.size * 4)
    tm, vmem_limit = _pick_tile_and_vmem(B, D, Hp, O, weight_bytes,
                                         jnp.dtype(x.dtype).itemsize)
    grid = (pl.cdiv(B, tm),)   # partial tail tile; out-of-bounds rows discarded

    def build(single_buffer_weights):
        res_kw = {}
        if single_buffer_weights:
            # Constant index_map => re-DMA-free; single buffer halves weight VMEM.
            res_kw = dict(pipeline_mode=pl.Buffered(1))
        return pl.pallas_call(
            _fnn2l_kernel,
            out_shape=jax.ShapeDtypeStruct((B, O), jnp.float32),
            grid=grid,
            in_specs=[
                pl.BlockSpec((tm, D), lambda i: (i, 0)),            # streamed x
                pl.BlockSpec((D, Hp), lambda i: (0, 0), **res_kw),  # resident W1
                pl.BlockSpec((1, Hp), lambda i: (0, 0), **res_kw),  # resident b1
                pl.BlockSpec((Hp, O), lambda i: (0, 0), **res_kw),  # resident W2'
                pl.BlockSpec((1, O), lambda i: (0, 0), **res_kw),   # resident b2'
            ],
            out_specs=pl.BlockSpec((tm, O), lambda i: (i, 0)),      # narrow f32 out
            compiler_params=pltpu.CompilerParams(
                dimension_semantics=("parallel",),     # v7x: batch split over 2 TCs
                vmem_limit_bytes=vmem_limit,
            ),
        )

    try:
        return build(True)(x, w1_p, b1_p, w2_p, b2_p)
    except Exception:
        # pl.Buffered(1) is an optional VMEM optimization; fall back to default
        # double buffering if this JAX build rejects pipeline_mode on BlockSpec.
        return build(False)(x, w1_p, b1_p, w2_p, b2_p)


# ----------------------------------------------------------------------------
# Parameter init mirroring the PyTorch module __init__ (eval mode).
# ----------------------------------------------------------------------------
def init_params(key, input_size, n_l1, for_sex=False):
    out_dim = 2 if for_sex else 1
    k1, k1b, k2, k2b = jax.random.split(key, 4)

    # xavier_uniform_ for nn.Linear(input_size, n_l1): weight [n_l1, input_size]
    bound1 = math.sqrt(6.0 / (input_size + n_l1))
    w1 = jax.random.uniform(k1, (n_l1, input_size), jnp.float32, -bound1, bound1).T
    bb1 = 1.0 / math.sqrt(input_size)                   # PyTorch default bias init
    b1 = jax.random.uniform(k1b, (1, n_l1), jnp.float32, -bb1, bb1)

    # BatchNorm1d: weight=1, bias=0, running_mean=0, running_var=1
    gamma = jnp.ones((1, n_l1), jnp.float32)
    beta = jnp.zeros((1, n_l1), jnp.float32)
    mean = jnp.zeros((1, n_l1), jnp.float32)
    var = jnp.ones((1, n_l1), jnp.float32)

    # xavier_uniform_ for nn.Linear(n_l1, out_dim): weight [out_dim, n_l1]
    bound2 = math.sqrt(6.0 / (n_l1 + out_dim))
    w2 = jax.random.uniform(k2, (out_dim, n_l1), jnp.float32, -bound2, bound2).T
    bb2 = 1.0 / math.sqrt(n_l1)
    b2 = jax.random.uniform(k2b, (1, out_dim), jnp.float32, -bb2, bb2)

    return (w1, b1, gamma, beta, mean, var, w2, b2)


def reference_forward(x, params):
    """Plain-JAX f32 reference (un-folded BN) for correctness check."""
    w1, b1, gamma, beta, mean, var, w2, b2 = params
    h = jnp.maximum(x @ w1 + b1, 0.0)
    h = (h - mean) * jax.lax.rsqrt(var + BN_EPS) * gamma + beta
    return h @ w2 + b2


if __name__ == "__main__":
    # TODO(synk): nn.Dropout is identity at inference; training-mode stochastic
    # dropout is not implemented in this kernel.
    key = jax.random.PRNGKey(0)
    kx1, kp1, kx2, kp2 = jax.random.split(key, 4)

    # Test 1: regression head (O=1), batch multiple of 8.
    B1, D1, H1 = 16, 32, 64
    x1 = jax.random.normal(kx1, (B1, D1), jnp.float32)
    params1 = init_params(kp1, D1, H1, for_sex=False)
    prepared1, dims1 = prepare_params(params1)          # BN fold + padding, once
    y1 = jax.block_until_ready(fnn_2l_forward(x1, prepared1, dims1))
    y1_ref = reference_forward(x1, params1)
    assert y1.shape == (B1, 1), y1.shape
    assert jnp.allclose(y1, y1_ref, atol=3e-2, rtol=3e-2), (
        f"test1 mismatch: max abs err {jnp.max(jnp.abs(y1 - y1_ref))}")

    # Test 2: sex head (O=2), batch NOT a multiple of 8 -> exercises the
    # partial-tile (cdiv) path; padded rows are masked on writeback.
    B2, D2, H2 = 13, 40, 48
    x2 = jax.random.normal(kx2, (B2, D2), jnp.float32)
    params2 = init_params(kp2, D2, H2, for_sex=True)
    prepared2, dims2 = prepare_params(params2)
    y2 = jax.block_until_ready(fnn_2l_forward(x2, prepared2, dims2))
    y2_ref = reference_forward(x2, params2)
    assert y2.shape == (B2, 2), y2.shape
    assert jnp.allclose(y2, y2_ref, atol=3e-2, rtol=3e-2), (
        f"test2 mismatch: max abs err {jnp.max(jnp.abs(y2 - y2_ref))}")

    print("KERNEL_OK")
</pallas_src>

<mosaic_0001>
module attributes {stable_mosaic.version = 11 : i64} {
  func.func @_fnn2l_kernel(%arg0: i32, %arg1: memref<16x32xf32, #tpu.memory_space<vmem>>, %arg2: memref<32x128xbf16, #tpu.memory_space<vmem>>, %arg3: memref<1x128xf32, #tpu.memory_space<vmem>>, %arg4: memref<128x1xf32, #tpu.memory_space<vmem>>, %arg5: memref<1x1xf32, #tpu.memory_space<vmem>>, %arg6: memref<16x1xf32, #tpu.memory_space<vmem>>) attributes {dimension_semantics = [#tpu.dimension_semantics<parallel>], iteration_bounds = array<i64: 1>, scalar_prefetch = 0 : i64, scratch_operands = 0 : i64, tpu.core_type = #tpu.core_type<tc>, window_params = [{transform_indices = @transform_0, window_bounds = array<i64: 16, 32>}, {pipeline_mode = #tpu.pipeline_mode<synchronous>, transform_indices = @transform_1, window_bounds = array<i64: 32, 128>}, {pipeline_mode = #tpu.pipeline_mode<synchronous>, transform_indices = @transform_2, window_bounds = array<i64: 1, 128>}, {pipeline_mode = #tpu.pipeline_mode<synchronous>, transform_indices = @transform_3, window_bounds = array<i64: 128, 1>}, {pipeline_mode = #tpu.pipeline_mode<synchronous>, transform_indices = @transform_4, window_bounds = array<i64: 1, 1>}, {transform_indices = @transform_5, window_bounds = array<i64: 16, 1>}]} {
    %c0 = arith.constant 0 : index
    %c0_0 = arith.constant 0 : index
    %0 = vector.load %arg1[%c0, %c0_0] : memref<16x32xf32, #tpu.memory_space<vmem>>, vector<16x32xf32>
    %1 = arith.truncf %0 : vector<16x32xf32> to vector<16x32xbf16>
    %c0_1 = arith.constant 0 : index
    %c0_2 = arith.constant 0 : index
    %2 = vector.load %arg2[%c0_1, %c0_2] : memref<32x128xbf16, #tpu.memory_space<vmem>>, vector<32x128xbf16>
    %cst = arith.constant dense<0.000000e+00> : vector<16x128xf32>
    %3 = tpu.matmul %1, %2, %cst {dimension_numbers = #tpu.dot_dimension_numbers<[1], [0], [0], [1], [0, 0, 1, 1], [], []>} : vector<16x32xbf16>, vector<32x128xbf16>, vector<16x128xf32> -> vector<16x128xf32>
    %c0_3 = arith.constant 0 : index
    %c0_4 = arith.constant 0 : index
    %4 = vector.load %arg3[%c0_3, %c0_4] : memref<1x128xf32, #tpu.memory_space<vmem>>, vector<1x128xf32>
    %5 = vector.broadcast %4 : vector<1x128xf32> to vector<16x128xf32>
    %6 = arith.addf %3, %5 : vector<16x128xf32>
    %cst_5 = arith.constant 0.000000e+00 : f32
    %7 = vector.broadcast %cst_5 : f32 to vector<16x128xf32>
    %8 = arith.maximumf %6, %7 : vector<16x128xf32>
    %c0_6 = arith.constant 0 : index
    %c0_7 = arith.constant 0 : index
    %9 = vector.load %arg4[%c0_6, %c0_7] : memref<128x1xf32, #tpu.memory_space<vmem>>, vector<128x1xf32>
    %cst_8 = arith.constant dense<0.000000e+00> : vector<16x1xf32>
    %10 = tpu.matmul %8, %9, %cst_8 {dimension_numbers = #tpu.dot_dimension_numbers<[1], [0], [0], [1], [0, 0, 1, 1], [], []>} : vector<16x128xf32>, vector<128x1xf32>, vector<16x1xf32> -> vector<16x1xf32>
    %c0_9 = arith.constant 0 : index
    %c0_10 = arith.constant 0 : index
    %11 = vector.load %arg5[%c0_9, %c0_10] : memref<1x1xf32, #tpu.memory_space<vmem>>, vector<1x1xf32>
    %12 = vector.broadcast %11 : vector<1x1xf32> to vector<16x1xf32>
    %13 = arith.addf %10, %12 : vector<16x1xf32>
    %c0_11 = arith.constant 0 : index
    %c0_12 = arith.constant 0 : index
    %14 = vector.load %arg6[%c0_11, %c0_12] : memref<16x1xf32, #tpu.memory_space<vmem>>, vector<16x1xf32>
    tpu.vector_store %arg6[%c0_11, %c0_12], %13 {strides = array<i32>} : memref<16x1xf32, #tpu.memory_space<vmem>>, vector<16x1xf32>,
    return
  }
  func.func @transform_0(%arg0: i32) -> (i32, i32) {
    %c0_i32 = arith.constant 0 : i32
    %c0_i32_0 = arith.constant 0 : i32
    return %arg0, %c0_i32 : i32, i32
  }
  func.func @transform_1(%arg0: i32) -> (i32, i32) {
    %c0_i32 = arith.constant 0 : i32
    %c0_i32_0 = arith.constant 0 : i32
    %c0_i32_1 = arith.constant 0 : i32
    return %c0_i32, %c0_i32_0 : i32, i32
  }
  func.func @transform_2(%arg0: i32) -> (i32, i32) {
    %c0_i32 = arith.constant 0 : i32
    %c0_i32_0 = arith.constant 0 : i32
    %c0_i32_1 = arith.constant 0 : i32
    return %c0_i32, %c0_i32_0 : i32, i32
  }
  func.func @transform_3(%arg0: i32) -> (i32, i32) {
    %c0_i32 = arith.constant 0 : i32
    %c0_i32_0 = arith.constant 0 : i32
    %c0_i32_1 = arith.constant 0 : i32
    return %c0_i32, %c0_i32_0 : i32, i32
  }
  func.func @transform_4(%arg0: i32) -> (i32, i32) {
    %c0_i32 = arith.constant 0 : i32
    %c0_i32_0 = arith.constant 0 : i32
    %c0_i32_1 = arith.constant 0 : i32
    return %c0_i32, %c0_i32_0 : i32, i32
  }
  func.func @transform_5(%arg0: i32) -> (i32, i32) {
    %c0_i32 = arith.constant 0 : i32
    %c0_i32_0 = arith.constant 0 : i32
    return %arg0, %c0_i32 : i32, i32
  }
}

module attributes {stable_mosaic.version = 11 : i64} {
  func.func @_fnn2l_kernel(%arg0: i32, %arg1: memref<16x32xf32, #tpu.memory_space<vmem>>, %arg2: memref<32x128xbf16, #tpu.memory_space<vmem>>, %arg3: memref<1x128xf32, #tpu.memory_space<vmem>>, %arg4: memref<128x1xf32, #tpu.memory_space<vmem>>, %arg5: memref<1x1xf32, #tpu.memory_space<vmem>>, %arg6: memref<16x1xf32, #tpu.memory_space<vmem>>) attributes {dimension_semantics = [#tpu.dimension_semantics<parallel>], iteration_bounds = array<i64: 1>, scalar_prefetch = 0 : i64, scratch_operands = 0 : i64, tpu.core_type = #tpu.core_type<tc>, window_params = [{transform_indices = @transform_0, window_bounds = array<i64: 16, 32>}, {pipeline_mode = #tpu.pipeline_mode<synchronous>, transform_indices = @transform_1, window_bounds = array<i64: 32, 128>}, {pipeline_mode = #tpu.pipeline_mode<synchronous>, transform_indices = @transform_2, window_bounds = array<i64: 1, 128>}, {pipeline_mode = #tpu.pipeline_mode<synchronous>, transform_indices = @transform_3, window_bounds = array<i64: 128, 1>}, {pipeline_mode = #tpu.pipeline_mode<synchronous>, transform_indices = @transform_4, window_bounds = array<i64: 1, 1>}, {transform_indices = @transform_5, window_bounds = array<i64: 16, 1>}]} {
    %c0 = arith.constant 0 : index
    %c0_0 = arith.constant 0 : index
    %0 = vector.load %arg1[%c0, %c0_0] : memref<16x32xf32, #tpu.memory_space<vmem>>, vector<16x32xf32>
    %1 = arith.truncf %0 : vector<16x32xf32> to vector<16x32xbf16>
    %c0_1 = arith.constant 0 : index
    %c0_2 = arith.constant 0 : index
    %2 = vector.load %arg2[%c0_1, %c0_2] : memref<32x128xbf16, #tpu.memory_space<vmem>>, vector<32x128xbf16>
    %cst = arith.constant dense<0.000000e+00> : vector<16x128xf32>
    %3 = tpu.matmul %1, %2, %cst {dimension_numbers = #tpu.dot_dimension_numbers<[1], [0], [0], [1], [0, 0, 1, 1], [], []>} : vector<16x32xbf16>, vector<32x128xbf16>, vector<16x128xf32> -> vector<16x128xf32>
    %c0_3 = arith.constant 0 : index
    %c0_4 = arith.constant 0 : index
    %4 = vector.load %arg3[%c0_3, %c0_4] : memref<1x128xf32, #tpu.memory_space<vmem>>, vector<1x128xf32>
    %5 = vector.broadcast %4 : vector<1x128xf32> to vector<16x128xf32>
    %6 = arith.addf %3, %5 : vector<16x128xf32>
    %cst_5 = arith.constant 0.000000e+00 : f32
    %7 = vector.broadcast %cst_5 : f32 to vector<16x128xf32>
    %8 = arith.maximumf %6, %7 : vector<16x128xf32>
    %c0_6 = arith.constant 0 : index
    %c0_7 = arith.constant 0 : index
    %9 = vector.load %arg4[%c0_6, %c0_7] : memref<128x1xf32, #tpu.memory_space<vmem>>, vector<128x1xf32>
    %cst_8 = arith.constant dense<0.000000e+00> : vector<16x1xf32>
    %10 = tpu.matmul %8, %9, %cst_8 {dimension_numbers = #tpu.dot_dimension_numbers<[1], [0], [0], [1], [0, 0, 1, 1], [], []>} : vector<16x128xf32>, vector<128x1xf32>, vector<16x1xf32> -> vector<16x1xf32>
    %c0_9 = arith.constant 0 : index
    %c0_10 = arith.constant 0 : index
    %11 = vector.load %arg5[%c0_9, %c0_10] : memref<1x1xf32, #tpu.memory_space<vmem>>, vector<1x1xf32>
    %12 = vector.broadcast %11 : vector<1x1xf32> to vector<16x1xf32>
    %13 = arith.addf %10, %12 : vector<16x1xf32>
    %c0_11 = arith.constant 0 : index
    %c0_12 = arith.constant 0 : index
    %14 = vector.load %arg6[%c0_11, %c0_12] : memref<16x1xf32, #tpu.memory_space<vmem>>, vector<16x1xf32>
    tpu.vector_store %arg6[%c0_11, %c0_12], %13 {strides = array<i32>} : memref<16x1xf32, #tpu.memory_space<vmem>>, vector<16x1xf32>,
    return
  }
  func.func @transform_0(%arg0: i32) -> (i32, i32) {
    %c0_i32 = arith.constant 0 : i32
    %c0_i32_0 = arith.constant 0 : i32
    return %arg0, %c0_i32 : i32, i32
  }
  func.func @transform_1(%arg0: i32) -> (i32, i32) {
    %c0_i32 = arith.constant 0 : i32
    %c0_i32_0 = arith.constant 0 : i32
    %c0_i32_1 = arith.constant 0 : i32
    return %c0_i32, %c0_i32_0 : i32, i32
  }
  func.func @transform_2(%arg0: i32) -> (i32, i32) {
    %c0_i32 = arith.constant 0 : i32
    %c0_i32_0 = arith.constant 0 : i32
    %c0_i32_1 = arith.constant 0 : i32
    return %c0_i32, %c0_i32_0 : i32, i32
  }
  func.func @transform_3(%arg0: i32) -> (i32, i32) {
    %c0_i32 = arith.constant 0 : i32
    %c0_i32_0 = arith.constant 0 : i32
    %c0_i32_1 = arith.constant 0 : i32
    return %c0_i32, %c0_i32_0 : i32, i32
  }
  func.func @transform_4(%arg0: i32) -> (i32, i32) {
    %c0_i32 = arith.constant 0 : i32
    %c0_i32_0 = arith.constant 0 : i32
    %c0_i32_1 = arith.constant 0 : i32
    return %c0_i32, %c0_i32_0 : i32, i32
  }
  func.func @transform_5(%arg0: i32) -> (i32, i32) {
    %c0_i32 = arith.constant 0 : i32
    %c0_i32_0 = arith.constant 0 : i32
    return %arg0, %c0_i32 : i32, i32
  }
}

</mosaic_0001>

<llo_original>
// kernel: tpu_custom_call.1
$region0: #{tpu_custom_call.1}
  #allocation0 [shape = 'u32[]', space=smem, size = 0x4, offset = 0x4, fixed_abs, tag = 'smem constant byte address 0x4 - core index']
  #allocation1 [shape = 'u32[144,128]{1,0:T(1,128)}', space=vmem, size = 0x12000, scoped, tag = 'internal scratch']
  #allocation2 [shape = 'f32[1,1]{1,0:T(1,128)S(1)}', space=vmem, size = 0x200, scoped, tag = 'scoped memory for tpu_custom_call.1']
  %s0 = inlined_call_operand.vmem [shape: f32[16,32], index: 0, kind: input, shape index: {}]
  %s1 = inlined_call_operand.vmem [shape: bf16[32,128], index: 1, kind: input, shape index: {}]
  %s2 = inlined_call_operand.vmem [shape: f32[1,128], index: 2, kind: input, shape index: {}]
  %s3 = inlined_call_operand.vmem [shape: f32[128,1], index: 3, kind: input, shape index: {}]
  %s4 = inlined_call_operand.<no memory space> [shape: f32[1,1], index: 4, kind: input, shape index: {}]
  %s5 = inlined_call_operand.vmem [shape: f32[16,1], index: 5, kind: output, shape index: {}]
  %s6 = sld [smem:[#allocation0]]
  $region30: #{tpu_custom_call.1} parent=0
    _
  %s8 = ssub.s32 1, %s6
  %s9 = scalar_select 0, %s8, %s6
  %v10 = vstv %s4
  %11 = vst [vmem:[#allocation2] sm:$0x1] %v10
  // Predicated region
  $region2: #{tpu_custom_call.1} parent=0 // pred_check
    _
  $region3: #{tpu_custom_call.1} parent=0 // pred_check_branch
    %13 = sbr.rel (0) target = $region5
  $region4: #{tpu_custom_call.1} parent=0 // pred_region
    _
  $region5: #{tpu_custom_call.1} parent=0 // pred_fallthru
    _
  // Predicated region
  $region6: #{tpu_custom_call.1} parent=0 // pred_check
    _
  $region7: #{tpu_custom_call.1} parent=0 // pred_check_branch
    %15 = sbr.rel (0) target = $region9
  $region8: #{tpu_custom_call.1} parent=0 // pred_region
    _
  $region9: #{tpu_custom_call.1} parent=0 // pred_fallthru
    _
  // Predicated region
  $region10: #{tpu_custom_call.1} parent=0 // pred_check
    _
  $region11: #{tpu_custom_call.1} parent=0 // pred_check_branch
    %17 = sbr.rel (0) target = $region13
  $region12: #{tpu_custom_call.1} parent=0 // pred_region
    _
  $region13: #{tpu_custom_call.1} parent=0 // pred_fallthru
    _
  // Predicated region
  $region14: #{tpu_custom_call.1} parent=0 // pred_check
    _
  $region15: #{tpu_custom_call.1} parent=0 // pred_check_branch
    %19 = sbr.rel (0) target = $region17
  $region16: #{tpu_custom_call.1} parent=0 // pred_region
    _
  $region17: #{tpu_custom_call.1} parent=0 // pred_fallthru
    _
  // Predicated region
  $region18: #{tpu_custom_call.1} parent=0 // pred_check
    _
  $region19: #{tpu_custom_call.1} parent=0 // pred_check_branch
    %21 = sbr.rel (0) target = $region21
  $region20: #{tpu_custom_call.1} parent=0 // pred_region
    _
  $region21: #{tpu_custom_call.1} parent=0 // pred_fallthru
    _
  %v23 = vld [vmem:[%s0] sm:$0xff]
  %v24 = vld [vmem:[%s0 + $0x8] sm:$0xff]
  %v25 = vpack.c.bf16 %v24, %v23
  %v26 = vld [vmem:[%s1] sm:$0xf]
  %v27 = vld [vmem:[%s1 + $0x4] sm:$0xf]
  %v28 = vld [vmem:[%s1 + $0x8] sm:$0xf]
  %v29 = vld [vmem:[%s1 + $0xc] sm:$0xf]
  %v30 = vld [vmem:[%s2] sm:$0x1]
  %v32 = vlaneseq
  %v33 = vshrl.u32 %v32, 7
  %v34 = vsub.s32 0, %v33
  %v35 = vrot.slane %v30, %v34
  %v41 = vunpack.c.l.b16 %v26
  %v42 = vunpack.c.l.b16 %v27
  %v43 = vunpack.c.l.b16 %v28
  %v44 = vunpack.c.l.b16 %v29
  %v45 = vpack.c.b16 %v42, %v41
  %v46 = vpack.c.b16 %v44, %v43
  %vm49 = vcmask 261120
  %v51 = vsel %vm49, %v25, 0
  %53 = vmatprep.subr.bf16.mxu0 0
  %54 = vmatpush1.bf16.msra.mxu0 %v45
  %55 = vmatprep.subr.bf16.mxu0 0
  %56 = vmatpush1.bf16.msra.mxu0 %v46
  %57 = vmatprep.subr.bf16.mxu0 0
  %58 = vmatpush1.bf16.msra.mxu0 0
  %59 = vmatprep.subr.bf16.mxu0 0
  %60 = vmatpush1.bf16.msra.mxu0 0
  %61 = vmatprep.subr.bf16.mxu0 0
  %62 = vmatpush1.bf16.msra.mxu0 0
  %63 = vmatprep.subr.bf16.mxu0 0
  %64 = vmatpush1.bf16.msra.mxu0 0
  %65 = vmatprep.subr.bf16.mxu0 0
  %66 = vmatpush1.bf16.msra.mxu0 0
  %67 = vmatprep.subr.bf16.mxu0 0
  %68 = vmatpush1.bf16.msra.mxu0 0
  %69 = vmatprep.subr.bf16.mxu0 0
  %70 = vmatpush1.bf16.msra.mxu0 0
  %71 = vmatprep.subr.bf16.mxu0 0
  %72 = vmatpush1.bf16.msra.mxu0 0
  %73 = vmatprep.subr.bf16.mxu0 0
  %74 = vmatpush1.bf16.msra.mxu0 0
  %75 = vmatprep.subr.bf16.mxu0 0
  %76 = vmatpush1.bf16.msra.mxu0 0
  %77 = vmatprep.subr.bf16.mxu0 0
  %78 = vmatpush1.bf16.msra.mxu0 0
  %79 = vmatprep.subr.bf16.mxu0 0
  %80 = vmatpush1.bf16.msra.mxu0 0
  %81 = vmatprep.subr.bf16.mxu0 0
  %82 = vmatpush1.bf16.msra.mxu0 0
  %83 = vmatprep.subr.bf16.mxu0 0
  %84 = vmatpush1.bf16.msra.mxu0 0
  %85 = vmatprep.mubr.bf16.mxu0 0
  %86 = vmatmul.mubr.bf16.gmra.mrb[0].mxu0 %v51
  %v87 = vpop.f32.mrb[0].mxu0
  %v88 = vadd.f32 %v35, %v87
  %v89 = vpop.f32.mrb[0].mxu0
  %v90 = vpop.f32.mrb[0].mxu0
  %v91 = vadd.f32 %v35, %v90
  %v92 = vpop.f32.mrb[0].mxu0
  %93 = vdwg.mxu0
  %v94 = vmax.f32 %v88, 0.0
  %v95 = vmax.f32 %v91, 0.0
  %v96 = vld [vmem:[%s3] sm:$0xff]
  %v97 = vld [vmem:[%s3 + $0x8] sm:$0xff]
  %v98 = vld [vmem:[%s3 + $0x10] sm:$0xff]
  %v99 = vld [vmem:[%s3 + $0x18] sm:$0xff]
  %v100 = vld [vmem:[%s3 + $0x20] sm:$0xff]
  %v101 = vld [vmem:[%s3 + $0x28] sm:$0xff]
  %v102 = vld [vmem:[%s3 + $0x30] sm:$0xff]
  %v103 = vld [vmem:[%s3 + $0x38] sm:$0xff]
  %v104 = vld [vmem:[%s3 + $0x40] sm:$0xff]
  %v105 = vld [vmem:[%s3 + $0x48] sm:$0xff]
  %v106 = vld [vmem:[%s3 + $0x50] sm:$0xff]
  %v107 = vld [vmem:[%s3 + $0x58] sm:$0xff]
  %v108 = vld [vmem:[%s3 + $0x60] sm:$0xff]
  %v109 = vld [vmem:[%s3 + $0x68] sm:$0xff]
  %v110 = vld [vmem:[%s3 + $0x70] sm:$0xff]
  %v111 = vld [vmem:[%s3 + $0x78] sm:$0xff]
  %v112 = vld [vmem:[#allocation2] sm:$0x1]
  %v114 = vlaneseq
  %v115 = vshrl.u32 %v114, 7
  %v116 = vsub.s32 0, %v115
  %v117 = vrot.slane %v112, %v116
  %119 = vmatprep.subr.mxu0 0.0
  %120 = vmatpush1.msra.mxu0 %v96
  %121 = vmatprep.subr.mxu0 0.0
  %122 = vmatpush1.msra.mxu0 %v97
  %123 = vmatprep.subr.mxu0 0.0
  %124 = vmatpush1.msra.mxu0 %v98
  %125 = vmatprep.subr.mxu0 0.0
  %126 = vmatpush1.msra.mxu0 %v99
  %127 = vmatprep.subr.mxu0 0.0
  %128 = vmatpush1.msra.mxu0 %v100
  %129 = vmatprep.subr.mxu0 0.0
  %130 = vmatpush1.msra.mxu0 %v101
  %131 = vmatprep.subr.mxu0 0.0
  %132 = vmatpush1.msra.mxu0 %v102
  %133 = vmatprep.subr.mxu0 0.0
  %134 = vmatpush1.msra.mxu0 %v103
  %135 = vmatprep.subr.mxu0 0.0
  %136 = vmatpush1.msra.mxu0 %v104
  %137 = vmatprep.subr.mxu0 0.0
  %138 = vmatpush1.msra.mxu0 %v105
  %139 = vmatprep.subr.mxu0 0.0
  %140 = vmatpush1.msra.mxu0 %v106
  %141 = vmatprep.subr.mxu0 0.0
  %142 = vmatpush1.msra.mxu0 %v107
  %143 = vmatprep.subr.mxu0 0.0
  %144 = vmatpush1.msra.mxu0 %v108
  %145 = vmatprep.subr.mxu0 0.0
  %146 = vmatpush1.msra.mxu0 %v109
  %147 = vmatprep.subr.mxu0 0.0
  %148 = vmatpush1.msra.mxu0 %v110
  %149 = vmatprep.subr.mxu0 0.0
  %150 = vmatpush1.msra.mxu0 %v111
  %151 = vmatprep.subr.mxu0 0.0
  %152 = vmatpush1.msra.mxu0 0.0
  %153 = vmatprep.subr.mxu0 0.0
  %154 = vmatpush1.msra.mxu0 0.0
  %155 = vmatprep.subr.mxu0 0.0
  %156 = vmatpush1.msra.mxu0 0.0
  %157 = vmatprep.subr.mxu0 0.0
  %158 = vmatpush1.msra.mxu0 0.0
  %159 = vmatprep.subr.mxu0 0.0
  %160 = vmatpush1.msra.mxu0 0.0
  %161 = vmatprep.subr.mxu0 0.0
  %162 = vmatpush1.msra.mxu0 0.0
  %163 = vmatprep.subr.mxu0 0.0
  %164 = vmatpush1.msra.mxu0 0.0
  %165 = vmatprep.subr.mxu0 0.0
  %166 = vmatpush1.msra.mxu0 0.0
  %167 = vmatprep.subr.mxu0 0.0
  %168 = vmatpush1.msra.mxu0 0.0
  %169 = vmatprep.subr.mxu0 0.0
  %170 = vmatpush1.msra.mxu0 0.0
  %171 = vmatprep.subr.mxu0 0.0
  %172 = vmatpush1.msra.mxu0 0.0
  %173 = vmatprep.subr.mxu0 0.0
  %174 = vmatpush1.msra.mxu0 0.0
  %175 = vmatprep.subr.mxu0 0.0
  %176 = vmatpush1.msra.mxu0 0.0
  %177 = vmatprep.subr.mxu0 0.0
  %178 = vmatpush1.msra.mxu0 0.0
  %179 = vmatprep.subr.mxu0 0.0
  %180 = vmatpush1.msra.mxu0 0.0
  %181 = vmatprep.subr.mxu0 0.0
  %182 = vmatpush1.msra.mxu0 0.0
  %183 = vmatprep.mubr.f32.mxu0 0.0
  %184 = vmatmul.mubr.f32.gmra.mrb[0].mxu0 %v94
  %v185 = vpop.f32.mrb[0].mxu0
  %v186 = vadd.f32 %v117, %v185
  %v187 = vpop.f32.mrb[0].mxu0
  %188 = vmatprep.mubr.f32.mxu0 0.0
  %189 = vmatmul.mubr.f32.gmra.mrb[0].mxu0 %v95
  %v190 = vpop.f32.mrb[0].mxu0
  %v191 = vadd.f32 %v117, %v190
  %v192 = vpop.f32.mrb[0].mxu0
  %193 = vdwg.mxu0
  %vm194 = vcmask 7168
  %195 = vst.msk [vmem:[%s5] sm:$0xff] %vm194, %v186
  %196 = vst.msk [vmem:[%s5 + $0x8] sm:$0xff] %vm194, %v191
  // Predicated region
  $region22: #{tpu_custom_call.1} parent=0 // pred_check
    _
  $region23: #{tpu_custom_call.1} parent=0 // pred_check_branch
    %198 = sbr.rel (0) target = $region25
  $region24: #{tpu_custom_call.1} parent=0 // pred_region
    _
  $region25: #{tpu_custom_call.1} parent=0 // pred_fallthru
    _
  // Predicated region
  $region26: #{tpu_custom_call.1} parent=0 // pred_check
    _
  $region27: #{tpu_custom_call.1} parent=0 // pred_check_branch
    %200 = sbr.rel (0) target = $region29
  $region28: #{tpu_custom_call.1} parent=0 // pred_region
    _
  $region29: #{tpu_custom_call.1} parent=0 // pred_fallthru
    _

// kernel: tpu_custom_call.1
$region0: #{tpu_custom_call.1}
  #allocation0 [shape = 'u32[]', space=smem, size = 0x4, offset = 0x4, fixed_abs, tag = 'smem constant byte address 0x4 - core index']
  #allocation1 [shape = 'u32[144,128]{1,0:T(1,128)}', space=vmem, size = 0x12000, scoped, tag = 'internal scratch']
  #allocation2 [shape = 'f32[1,1]{1,0:T(1,128)S(1)}', space=vmem, size = 0x200, scoped, tag = 'scoped memory for tpu_custom_call.1']
  %s0 = inlined_call_operand.vmem [shape: f32[16,32], index: 0, kind: input, shape index: {}]
  %s1 = inlined_call_operand.vmem [shape: bf16[32,128], index: 1, kind: input, shape index: {}]
  %s2 = inlined_call_operand.vmem [shape: f32[1,128], index: 2, kind: input, shape index: {}]
  %s3 = inlined_call_operand.vmem [shape: f32[128,1], index: 3, kind: input, shape index: {}]
  %s4 = inlined_call_operand.<no memory space> [shape: f32[1,1], index: 4, kind: input, shape index: {}]
  %s5 = inlined_call_operand.vmem [shape: f32[16,1], index: 5, kind: output, shape index: {}]
  %s6 = sld [smem:[#allocation0]]
  $region30: #{tpu_custom_call.1} parent=0
    _
  %s8 = ssub.s32 1, %s6
  %s9 = scalar_select 0, %s8, %s6
  %v10 = vstv %s4
  %11 = vst [vmem:[#allocation2] sm:$0x1] %v10
  // Predicated region
  $region2: #{tpu_custom_call.1} parent=0 // pred_check
    _
  $region3: #{tpu_custom_call.1} parent=0 // pred_check_branch
    %13 = sbr.rel (0) target = $region5
  $region4: #{tpu_custom_call.1} parent=0 // pred_region
    _
  $region5: #{tpu_custom_call.1} parent=0 // pred_fallthru
    _
  // Predicated region
  $region6: #{tpu_custom_call.1} parent=0 // pred_check
    _
  $region7: #{tpu_custom_call.1} parent=0 // pred_check_branch
    %15 = sbr.rel (0) target = $region9
  $region8: #{tpu_custom_call.1} parent=0 // pred_region
    _
  $region9: #{tpu_custom_call.1} parent=0 // pred_fallthru
    _
  // Predicated region
  $region10: #{tpu_custom_call.1} parent=0 // pred_check
    _
  $region11: #{tpu_custom_call.1} parent=0 // pred_check_branch
    %17 = sbr.rel (0) target = $region13
  $region12: #{tpu_custom_call.1} parent=0 // pred_region
    _
  $region13: #{tpu_custom_call.1} parent=0 // pred_fallthru
    _
  // Predicated region
  $region14: #{tpu_custom_call.1} parent=0 // pred_check
    _
  $region15: #{tpu_custom_call.1} parent=0 // pred_check_branch
    %19 = sbr.rel (0) target = $region17
  $region16: #{tpu_custom_call.1} parent=0 // pred_region
    _
  $region17: #{tpu_custom_call.1} parent=0 // pred_fallthru
    _
  // Predicated region
  $region18: #{tpu_custom_call.1} parent=0 // pred_check
    _
  $region19: #{tpu_custom_call.1} parent=0 // pred_check_branch
    %21 = sbr.rel (0) target = $region21
  $region20: #{tpu_custom_call.1} parent=0 // pred_region
    _
  $region21: #{tpu_custom_call.1} parent=0 // pred_fallthru
    _
  %v23 = vld [vmem:[%s0] sm:$0xff]
  %v24 = vld [vmem:[%s0 + $0x8] sm:$0xff]
  %v25 = vpack.c.bf16 %v24, %v23
  %v26 = vld [vmem:[%s1] sm:$0xf]
  %v27 = vld [vmem:[%s1 + $0x4] sm:$0xf]
  %v28 = vld [vmem:[%s1 + $0x8] sm:$0xf]
  %v29 = vld [vmem:[%s1 + $0xc] sm:$0xf]
  %v30 = vld [vmem:[%s2] sm:$0x1]
  %v32 = vlaneseq
  %v33 = vshrl.u32 %v32, 7
  %v34 = vsub.s32 0, %v33
  %v35 = vrot.slane %v30, %v34
  %v41 = vunpack.c.l.b16 %v26
  %v42 = vunpack.c.l.b16 %v27
  %v43 = vunpack.c.l.b16 %v28
  %v44 = vunpack.c.l.b16 %v29
  %v45 = vpack.c.b16 %v42, %v41
  %v46 = vpack.c.b16 %v44, %v43
  %vm49 = vcmask 261120
  %v51 = vsel %vm49, %v25, 0
  %53 = vmatprep.subr.bf16.mxu0 0
  %54 = vmatpush1.bf16.msra.mxu0 %v45
  %55 = vmatprep.subr.bf16.mxu0 0
  %56 = vmatpush1.bf16.msra.mxu0 %v46
  %57 = vmatprep.subr.bf16.mxu0 0
  %58 = vmatpush1.bf16.msra.mxu0 0
  %59 = vmatprep.subr.bf16.mxu0 0
  %60 = vmatpush1.bf16.msra.mxu0 0
  %61 = vmatprep.subr.bf16.mxu0 0
  %62 = vmatpush1.bf16.msra.mxu0 0
  %63 = vmatprep.subr.bf16.mxu0 0
  %64 = vmatpush1.bf16.msra.mxu0 0
  %65 = vmatprep.subr.bf16.mxu0 0
  %66 = vmatpush1.bf16.msra.mxu0 0
  %67 = vmatprep.subr.bf16.mxu0 0
  %68 = vmatpush1.bf16.msra.mxu0 0
  %69 = vmatprep.subr.bf16.mxu0 0
  %70 = vmatpush1.bf16.msra.mxu0 0
  %71 = vmatprep.subr.bf16.mxu0 0
  %72 = vmatpush1.bf16.msra.mxu0 0
  %73 = vmatprep.subr.bf16.mxu0 0
  %74 = vmatpush1.bf16.msra.mxu0 0
  %75 = vmatprep.subr.bf16.mxu0 0
  %76 = vmatpush1.bf16.msra.mxu0 0
  %77 = vmatprep.subr.bf16.mxu0 0
  %78 = vmatpush1.bf16.msra.mxu0 0
  %79 = vmatprep.subr.bf16.mxu0 0
  %80 = vmatpush1.bf16.msra.mxu0 0
  %81 = vmatprep.subr.bf16.mxu0 0
  %82 = vmatpush1.bf16.msra.mxu0 0
  %83 = vmatprep.subr.bf16.mxu0 0
  %84 = vmatpush1.bf16.msra.mxu0 0
  %85 = vmatprep.mubr.bf16.mxu0 0
  %86 = vmatmul.mubr.bf16.gmra.mrb[0].mxu0 %v51
  %v87 = vpop.f32.mrb[0].mxu0
  %v88 = vadd.f32 %v35, %v87
  %v89 = vpop.f32.mrb[0].mxu0
  %v90 = vpop.f32.mrb[0].mxu0
  %v91 = vadd.f32 %v35, %v90
  %v92 = vpop.f32.mrb[0].mxu0
  %93 = vdwg.mxu0
  %v94 = vmax.f32 %v88, 0.0
  %v95 = vmax.f32 %v91, 0.0
  %v96 = vld [vmem:[%s3] sm:$0xff]
  %v97 = vld [vmem:[%s3 + $0x8] sm:$0xff]
  %v98 = vld [vmem:[%s3 + $0x10] sm:$0xff]
  %v99 = vld [vmem:[%s3 + $0x18] sm:$0xff]
  %v100 = vld [vmem:[%s3 + $0x20] sm:$0xff]
  %v101 = vld [vmem:[%s3 + $0x28] sm:$0xff]
  %v102 = vld [vmem:[%s3 + $0x30] sm:$0xff]
  %v103 = vld [vmem:[%s3 + $0x38] sm:$0xff]
  %v104 = vld [vmem:[%s3 + $0x40] sm:$0xff]
  %v105 = vld [vmem:[%s3 + $0x48] sm:$0xff]
  %v106 = vld [vmem:[%s3 + $0x50] sm:$0xff]
  %v107 = vld [vmem:[%s3 + $0x58] sm:$0xff]
  %v108 = vld [vmem:[%s3 + $0x60] sm:$0xff]
  %v109 = vld [vmem:[%s3 + $0x68] sm:$0xff]
  %v110 = vld [vmem:[%s3 + $0x70] sm:$0xff]
  %v111 = vld [vmem:[%s3 + $0x78] sm:$0xff]
  %v112 = vld [vmem:[#allocation2] sm:$0x1]
  %v114 = vlaneseq
  %v115 = vshrl.u32 %v114, 7
  %v116 = vsub.s32 0, %v115
  %v117 = vrot.slane %v112, %v116
  %119 = vmatprep.subr.mxu0 0.0
  %120 = vmatpush1.msra.mxu0 %v96
  %121 = vmatprep.subr.mxu0 0.0
  %122 = vmatpush1.msra.mxu0 %v97
  %123 = vmatprep.subr.mxu0 0.0
  %124 = vmatpush1.msra.mxu0 %v98
  %125 = vmatprep.subr.mxu0 0.0
  %126 = vmatpush1.msra.mxu0 %v99
  %127 = vmatprep.subr.mxu0 0.0
  %128 = vmatpush1.msra.mxu0 %v100
  %129 = vmatprep.subr.mxu0 0.0
  %130 = vmatpush1.msra.mxu0 %v101
  %131 = vmatprep.subr.mxu0 0.0
  %132 = vmatpush1.msra.mxu0 %v102
  %133 = vmatprep.subr.mxu0 0.0
  %134 = vmatpush1.msra.mxu0 %v103
  %135 = vmatprep.subr.mxu0 0.0
  %136 = vmatpush1.msra.mxu0 %v104
  %137 = vmatprep.subr.mxu0 0.0
  %138 = vmatpush1.msra.mxu0 %v105
  %139 = vmatprep.subr.mxu0 0.0
  %140 = vmatpush1.msra.mxu0 %v106
  %141 = vmatprep.subr.mxu0 0.0
  %142 = vmatpush1.msra.mxu0 %v107
  %143 = vmatprep.subr.mxu0 0.0
  %144 = vmatpush1.msra.mxu0 %v108
  %145 = vmatprep.subr.mxu0 0.0
  %146 = vmatpush1.msra.mxu0 %v109
  %147 = vmatprep.subr.mxu0 0.0
  %148 = vmatpush1.msra.mxu0 %v110
  %149 = vmatprep.subr.mxu0 0.0
  %150 = vmatpush1.msra.mxu0 %v111
  %151 = vmatprep.subr.mxu0 0.0
  %152 = vmatpush1.msra.mxu0 0.0
  %153 = vmatprep.subr.mxu0 0.0
  %154 = vmatpush1.msra.mxu0 0.0
  %155 = vmatprep.subr.mxu0 0.0
  %156 = vmatpush1.msra.mxu0 0.0
  %157 = vmatprep.subr.mxu0 0.0
  %158 = vmatpush1.msra.mxu0 0.0
  %159 = vmatprep.subr.mxu0 0.0
  %160 = vmatpush1.msra.mxu0 0.0
  %161 = vmatprep.subr.mxu0 0.0
  %162 = vmatpush1.msra.mxu0 0.0
  %163 = vmatprep.subr.mxu0 0.0
  %164 = vmatpush1.msra.mxu0 0.0
  %165 = vmatprep.subr.mxu0 0.0
  %166 = vmatpush1.msra.mxu0 0.0
  %167 = vmatprep.subr.mxu0 0.0
  %168 = vmatpush1.msra.mxu0 0.0
  %169 = vmatprep.subr.mxu0 0.0
  %170 = vmatpush1.msra.mxu0 0.0
  %171 = vmatprep.subr.mxu0 0.0
  %172 = vmatpush1.msra.mxu0 0.0
  %173 = vmatprep.subr.mxu0 0.0
  %174 = vmatpush1.msra.mxu0 0.0
  %175 = vmatprep.subr.mxu0 0.0
  %176 = vmatpush1.msra.mxu0 0.0
  %177 = vmatprep.subr.mxu0 0.0
  %178 = vmatpush1.msra.mxu0 0.0
  %179 = vmatprep.subr.mxu0 0.0
  %180 = vmatpush1.msra.mxu0 0.0
  %181 = vmatprep.subr.mxu0 0.0
  %182 = vmatpush1.msra.mxu0 0.0
  %183 = vmatprep.mubr.f32.mxu0 0.0
  %184 = vmatmul.mubr.f32.gmra.mrb[0].mxu0 %v94
  %v185 = vpop.f32.mrb[0].mxu0
  %v186 = vadd.f32 %v117, %v185
  %v187 = vpop.f32.mrb[0].mxu0
  %188 = vmatprep.mubr.f32.mxu0 0.0
  %189 = vmatmul.mubr.f32.gmra.mrb[0].mxu0 %v95
  %v190 = vpop.f32.mrb[0].mxu0
  %v191 = vadd.f32 %v117, %v190
  %v192 = vpop.f32.mrb[0].mxu0
  %193 = vdwg.mxu0
  %vm194 = vcmask 7168
  %195 = vst.msk [vmem:[%s5] sm:$0xff] %vm194, %v186
  %196 = vst.msk [vmem:[%s5 + $0x8] sm:$0xff] %vm194, %v191
  // Predicated region
  $region22: #{tpu_custom_call.1} parent=0 // pred_check
    _
  $region23: #{tpu_custom_call.1} parent=0 // pred_check_branch
    %198 = sbr.rel (0) target = $region25
  $region24: #{tpu_custom_call.1} parent=0 // pred_region
    _
  $region25: #{tpu_custom_call.1} parent=0 // pred_fallthru
    _
  // Predicated region
  $region26: #{tpu_custom_call.1} parent=0 // pred_check
    _
  $region27: #{tpu_custom_call.1} parent=0 // pred_check_branch
    %200 = sbr.rel (0) target = $region29
  $region28: #{tpu_custom_call.1} parent=0 // pred_region
    _
  $region29: #{tpu_custom_call.1} parent=0 // pred_fallthru
    _

</llo_original>
